<compile_context>
chip_gen: v7x
topology: tpu7x:2x2x1
jax: 0.10.0
libtpu: 0.0.40
codegen_flags: <defaults>
</compile_context>

<pallas_src>
import functools

import jax
import jax.numpy as jnp
from jax import lax
from jax.experimental import pallas as pl
from jax.experimental.pallas import tpu as pltpu


def _ce_kernel(logits_ref, labels_ref, sum_ref, cnt_ref,
               acc_loss_ref, acc_cnt_ref, *, ignore_index, hw, tile):
    o = pl.program_id(1)
    i = pl.program_id(2)
    n_i = pl.num_programs(2)

    # Per (batch, outer-group) init of the vector accumulators.
    @pl.when(i == 0)
    def _():
        acc_loss_ref[...] = jnp.zeros_like(acc_loss_ref)
        acc_cnt_ref[...] = jnp.zeros_like(acc_cnt_ref)

    labels = labels_ref[0].astype(jnp.int32)          # (1, T) upcast on-chip
    logits = logits_ref[0].astype(jnp.float32)        # (C, T) classes on sublanes

    # Numerically stable log-sum-exp over the class (sublane) axis.  Both reductions
    # use the max-shifted logits so the raw f32 upcast can die early (lower VMEM peak):
    #   loss = lse - logits[label] = log(sum exp(shifted)) - shifted[label]
    m = jnp.max(logits, axis=0, keepdims=True)                         # (1, T)
    shifted = logits - m                                               # (C, T)
    denom = jnp.sum(jnp.exp(shifted), axis=0, keepdims=True)           # (1, T)

    # Gather the shifted logit at the label class via an in-register (C, 1) iota
    # (no VMEM iota slab, no extra vld stream per step).
    class_iota = lax.broadcasted_iota(jnp.int32, (shifted.shape[0], 1), 0)
    picked = jnp.sum(jnp.where(class_iota == labels, shifted, 0.0),
                     axis=0, keepdims=True)                            # (1, T)

    # Validity: not ignore_index AND inside the true spatial extent (the ragged last
    # tile overruns HW; its logits/labels are unspecified and must not touch the
    # loss OR the valid count).
    lane = lax.broadcasted_iota(jnp.int32, labels.shape, 1)            # (1, T)
    start = (o * n_i + i) * tile
    in_bounds = (start + lane) < hw
    valid = (labels != ignore_index) & in_bounds

    loss = jnp.where(valid, jnp.log(denom) - picked, 0.0)

    # Vector accumulation only (VPU); no cross-lane reduce in the steady state.
    acc_loss_ref[...] += loss
    acc_cnt_ref[...] += valid.astype(jnp.float32)

    # Finalize this (batch, outer) group: one cross-lane reduce, write partials.
    @pl.when(i == n_i - 1)
    def _():
        sum_ref[...] = jnp.sum(acc_loss_ref[...]).reshape(1, 1, 1)
        cnt_ref[...] = jnp.sum(acc_cnt_ref[...]).reshape(1, 1, 1)


def _choose_tile(num_classes, hw, itemsize):
    """Lane tile (multiple of 128), sized from an explicit VMEM working-set budget."""
    itemsize = int(itemsize)
    packing = max(1, 4 // itemsize)
    sub = 8 * packing
    c_in = -(-num_classes // sub) * sub        # sublane-padded classes, input dtype
    c_f32 = -(-num_classes // 8) * 8           # sublane-padded classes, f32 math

    # Approximate VMEM bytes per lane of tile:
    #   2x double-buffered logits block (input dtype, padded C)
    # + 2x double-buffered labels block (int32, padded to 8 sublanes)
    # + ~3 live full-height f32 temporaries (shifted / exp / select)
    # + ~8 single-row f32 slabs (accumulators, lse, masks, ...; 8-sublane padded)
    per_lane = 2 * c_in * itemsize + 2 * 8 * 4 + 3 * c_f32 * 4 + 8 * 8 * 4
    budget = 18 * 1024 * 1024                  # headroom under 32 MiB scoped VMEM (v7x-safe)

    tile = max(128, (budget // per_lane) // 128 * 128)
    # No point in a tile wider than the spatial extent; round HW *down* to 128 so any
    # overrun stays a standard partial last block handled by the in-kernel mask.
    hw_cap = max(128, hw // 128 * 128)
    return min(tile, hw_cap)


def _choose_outer(batch, num_tiles):
    """Split spatial tiles into an extra 'parallel' grid axis when the batch axis alone
    cannot feed both TensorCores (v7x has 2 TCs).  Must divide num_tiles exactly so no
    grid step maps to a fully out-of-bounds block."""
    if batch >= 2 or num_tiles < 2:
        return 1
    for s in (2, 4, 3, 5):
        if num_tiles % s == 0:
            return s
    return 1


def cross_entropy(logits_nchw, labels_bhw, *, ignore_index=255):
    """Mean cross-entropy over non-ignored pixels (matches nn.CrossEntropyLoss)."""
    B, C, H, W = logits_nchw.shape
    HW = H * W

    # Free reshapes only — no transpose, no pad, no dtype copy; HBM traffic is one
    # read of the logits plus one read of the labels.
    logits = logits_nchw.reshape(B, C, HW)
    labels = labels_bhw.reshape(B, 1, HW)

    itemsize = jnp.dtype(logits.dtype).itemsize
    tile = _choose_tile(C, HW, itemsize)
    num_tiles = pl.cdiv(HW, tile)
    n_outer = _choose_outer(B, num_tiles)
    n_inner = num_tiles // n_outer

    kernel = functools.partial(_ce_kernel, ignore_index=ignore_index, hw=HW, tile=tile)

    loss_sum, valid_cnt = pl.pallas_call(
        kernel,
        out_shape=(
            jax.ShapeDtypeStruct((B, n_outer, 1), jnp.float32),
            jax.ShapeDtypeStruct((B, n_outer, 1), jnp.float32),
        ),
        grid_spec=pltpu.PrefetchScalarGridSpec(
            num_scalar_prefetch=0,
            grid=(B, n_outer, n_inner),
            in_specs=[
                pl.BlockSpec((1, C, tile), lambda b, o, i: (b, 0, o * n_inner + i)),
                pl.BlockSpec((1, 1, tile), lambda b, o, i: (b, 0, o * n_inner + i)),
            ],
            out_specs=[
                pl.BlockSpec((1, 1, 1), lambda b, o, i: (b, o, 0)),
                pl.BlockSpec((1, 1, 1), lambda b, o, i: (b, o, 0)),
            ],
            scratch_shapes=[
                pltpu.VMEM((1, tile), jnp.float32),   # loss accumulator
                pltpu.VMEM((1, tile), jnp.float32),   # valid-count accumulator
            ],
        ),
        compiler_params=pltpu.CompilerParams(
            dimension_semantics=("parallel", "parallel", "arbitrary"),
            vmem_limit_bytes=32 * 1024 * 1024,
        ),
    )(logits, labels)

    # reduction='mean' with ignore_index: divide by number of valid targets.
    return (jnp.sum(loss_sum) / jnp.sum(valid_cnt)).astype(jnp.float32)


def _reference(logits_nchw, labels_bhw, ignore_index=255):
    B, C, H, W = logits_nchw.shape
    x = jnp.transpose(logits_nchw, (0, 2, 3, 1)).reshape(-1, C).astype(jnp.float32)
    y = labels_bhw.reshape(-1).astype(jnp.int32)
    logp = jax.nn.log_softmax(x, axis=-1)
    picked = jnp.take_along_axis(logp, jnp.clip(y, 0, C - 1)[:, None], axis=-1)[:, 0]
    valid = (y != ignore_index).astype(jnp.float32)
    return jnp.sum(-picked * valid) / jnp.sum(valid)


if __name__ == "__main__":
    key = jax.random.PRNGKey(0)
    k1, k2, k3, k4, k5 = jax.random.split(key, 5)

    # Case 1: aligned spatial extent, B >= 2 (batch axis feeds megacore).
    B, C, H, W = 2, 4, 16, 16
    logits = jax.random.normal(k1, (B, C, H, W), dtype=jnp.float32)
    labels = jax.random.randint(k2, (B, H, W), 0, C, dtype=jnp.int32)
    ignore_mask = jax.random.bernoulli(k3, 0.2, (B, H, W))
    labels = jnp.where(ignore_mask, jnp.int32(255), labels)

    loss = cross_entropy(logits, labels)
    jax.block_until_ready(loss)
    ref = _reference(logits, labels)
    assert jnp.allclose(loss, ref, atol=1e-5, rtol=1e-5), (loss, ref)

    # Case 2: unaligned spatial extent with B == 1 — exercises the in-kernel
    # ragged-tile lane masking (no logits pad) and the outer spatial split that
    # feeds both TensorCores on v7x.
    B2, C2, H2, W2 = 1, 5, 10, 15
    logits2 = jax.random.normal(k4, (B2, C2, H2, W2), dtype=jnp.float32)
    labels2 = jax.random.randint(k5, (B2, H2, W2), 0, C2, dtype=jnp.int32)

    loss2 = cross_entropy(logits2, labels2)
    jax.block_until_ready(loss2)
    ref2 = _reference(logits2, labels2)
    assert jnp.allclose(loss2, ref2, atol=1e-5, rtol=1e-5), (loss2, ref2)

    print("KERNEL_OK")
</pallas_src>

<mosaic_0001>
module attributes {stable_mosaic.version = 11 : i64} {
  func.func @_ce_kernel(%arg0: i32, %arg1: i32, %arg2: i32, %arg3: memref<1x4x256xf32, #tpu.memory_space<vmem>>, %arg4: memref<1x1x256xi32, #tpu.memory_space<vmem>>, %arg5: memref<1x1x1xf32, #tpu.memory_space<vmem>>, %arg6: memref<1x1x1xf32, #tpu.memory_space<vmem>>, %arg7: memref<1x256xf32, #tpu.memory_space<vmem>>, %arg8: memref<1x256xf32, #tpu.memory_space<vmem>>) attributes {dimension_semantics = [#tpu.dimension_semantics<parallel>, #tpu.dimension_semantics<parallel>, #tpu.dimension_semantics<arbitrary>], iteration_bounds = array<i64: 2, 1, 1>, scalar_prefetch = 0 : i64, scratch_operands = 2 : i64, tpu.core_type = #tpu.core_type<tc>, window_params = [{transform_indices = @transform_0, window_bounds = array<i64: 1, 4, 256>}, {transform_indices = @transform_1, window_bounds = array<i64: 1, 1, 256>}, {transform_indices = @transform_2, window_bounds = array<i64: 1, 1, 1>}, {transform_indices = @transform_3, window_bounds = array<i64: 1, 1, 1>}]} {
    %c0_i32 = arith.constant 0 : i32
    %0 = arith.cmpi eq, %arg2, %c0_i32 : i32
    %1 = arith.extui %0 : i1 to i32
    %c0_i32_0 = arith.constant 0 : i32
    %2 = arith.cmpi ne, %1, %c0_i32_0 : i32
    scf.if %2 {
      %cst_21 = arith.constant 0.000000e+00 : f32
      %48 = vector.broadcast %cst_21 : f32 to vector<1x256xf32>
      %c0_22 = arith.constant 0 : index
      %c0_23 = arith.constant 0 : index
      %49 = vector.load %arg7[%c0_22, %c0_23] : memref<1x256xf32, #tpu.memory_space<vmem>>, vector<1x256xf32>
      tpu.vector_store %arg7[%c0_22, %c0_23], %48 {strides = array<i32>} : memref<1x256xf32, #tpu.memory_space<vmem>>, vector<1x256xf32>,
      %cst_24 = arith.constant 0.000000e+00 : f32
      %50 = vector.broadcast %cst_24 : f32 to vector<1x256xf32>
      %c0_25 = arith.constant 0 : index
      %c0_26 = arith.constant 0 : index
      %51 = vector.load %arg8[%c0_25, %c0_26] : memref<1x256xf32, #tpu.memory_space<vmem>>, vector<1x256xf32>
      tpu.vector_store %arg8[%c0_25, %c0_26], %50 {strides = array<i32>} : memref<1x256xf32, #tpu.memory_space<vmem>>, vector<1x256xf32>,
    } else {
    }
    %c0 = arith.constant 0 : index
    %c0_1 = arith.constant 0 : index
    %c0_2 = arith.constant 0 : index
    %3 = vector.load %arg4[%c0, %c0_1, %c0_2] : memref<1x1x256xi32, #tpu.memory_space<vmem>>, vector<1x1x256xi32>
    %4 = vector.shape_cast %3 : vector<1x1x256xi32> to vector<1x256xi32>
    %c0_3 = arith.constant 0 : index
    %c0_4 = arith.constant 0 : index
    %c0_5 = arith.constant 0 : index
    %5 = vector.load %arg3[%c0_3, %c0_4, %c0_5] : memref<1x4x256xf32, #tpu.memory_space<vmem>>, vector<1x4x256xf32>
    %6 = vector.shape_cast %5 : vector<1x4x256xf32> to vector<4x256xf32>
    %cst = arith.constant dense<0xFF800000> : vector<256xf32>
    %7 = vector.multi_reduction <maximumf>, %6, %cst [0] : vector<4x256xf32> to vector<256xf32>
    %8 = vector.shape_cast %7 : vector<256xf32> to vector<1x256xf32>
    %9 = vector.broadcast %8 : vector<1x256xf32> to vector<4x256xf32>
    %10 = arith.subf %6, %9 : vector<4x256xf32>
    %11 = math.exp %10 : vector<4x256xf32>
    %cst_6 = arith.constant dense<0.000000e+00> : vector<256xf32>
    %12 = vector.multi_reduction <add>, %11, %cst_6 [0] : vector<4x256xf32> to vector<256xf32>
    %13 = vector.shape_cast %12 : vector<256xf32> to vector<1x256xf32>
    %14 = tpu.iota {dimensions = array<i32: 0>} : vector<4x1xi32>
    %15 = vector.broadcast %14 : vector<4x1xi32> to vector<4x256xi32>
    %16 = vector.broadcast %4 : vector<1x256xi32> to vector<4x256xi32>
    %17 = arith.cmpi eq, %15, %16 : vector<4x256xi32>
    %cst_7 = arith.constant 0.000000e+00 : f32
    %18 = vector.broadcast %cst_7 : f32 to vector<4x256xf32>
    %19 = arith.select %17, %10, %18 : vector<4x256xi1>, vector<4x256xf32>
    %cst_8 = arith.constant dense<0.000000e+00> : vector<256xf32>
    %20 = vector.multi_reduction <add>, %19, %cst_8 [0] : vector<4x256xf32> to vector<256xf32>
    %21 = vector.shape_cast %20 : vector<256xf32> to vector<1x256xf32>
    %22 = tpu.iota {dimensions = array<i32: 1>} : vector<1x256xi32>
    %c1_i32 = arith.constant 1 : i32
    %23 = arith.muli %arg1, %c1_i32 : i32
    %24 = arith.addi %23, %arg2 : i32
    %c256_i32 = arith.constant 256 : i32
    %25 = arith.muli %24, %c256_i32 : i32
    %26 = vector.broadcast %25 : i32 to vector<1x256xi32>
    %27 = arith.addi %26, %22 : vector<1x256xi32>
    %c256_i32_9 = arith.constant 256 : i32
    %28 = vector.broadcast %c256_i32_9 : i32 to vector<1x256xi32>
    %29 = arith.cmpi slt, %27, %28 : vector<1x256xi32>
    %c255_i32 = arith.constant 255 : i32
    %30 = vector.broadcast %c255_i32 : i32 to vector<1x256xi32>
    %31 = arith.cmpi ne, %4, %30 : vector<1x256xi32>
    %32 = arith.andi %31, %29 : vector<1x256xi1>
    %33 = math.log %13 : vector<1x256xf32>
    %34 = arith.subf %33, %21 : vector<1x256xf32>
    %cst_10 = arith.constant 0.000000e+00 : f32
    %35 = vector.broadcast %cst_10 : f32 to vector<1x256xf32>
    %36 = arith.select %32, %34, %35 : vector<1x256xi1>, vector<1x256xf32>
    %c0_11 = arith.constant 0 : index
    %c0_12 = arith.constant 0 : index
    %37 = vector.load %arg7[%c0_11, %c0_12] : memref<1x256xf32, #tpu.memory_space<vmem>>, vector<1x256xf32>
    %38 = arith.addf %37, %36 : vector<1x256xf32>
    %c0_13 = arith.constant 0 : index
    %c0_14 = arith.constant 0 : index
    %39 = vector.load %arg7[%c0_13, %c0_14] : memref<1x256xf32, #tpu.memory_space<vmem>>, vector<1x256xf32>
    tpu.vector_store %arg7[%c0_13, %c0_14], %38 {strides = array<i32>} : memref<1x256xf32, #tpu.memory_space<vmem>>, vector<1x256xf32>,
    %c0_15 = arith.constant 0 : index
    %c0_16 = arith.constant 0 : index
    %40 = vector.load %arg8[%c0_15, %c0_16] : memref<1x256xf32, #tpu.memory_space<vmem>>, vector<1x256xf32>
    %41 = arith.extui %32 : vector<1x256xi1> to vector<1x256xi32>
    %42 = arith.sitofp %41 : vector<1x256xi32> to vector<1x256xf32>
    %43 = arith.addf %40, %42 : vector<1x256xf32>
    %c0_17 = arith.constant 0 : index
    %c0_18 = arith.constant 0 : index
    %44 = vector.load %arg8[%c0_17, %c0_18] : memref<1x256xf32, #tpu.memory_space<vmem>>, vector<1x256xf32>
    tpu.vector_store %arg8[%c0_17, %c0_18], %43 {strides = array<i32>} : memref<1x256xf32, #tpu.memory_space<vmem>>, vector<1x256xf32>,
    %c0_i32_19 = arith.constant 0 : i32
    %45 = arith.cmpi eq, %arg2, %c0_i32_19 : i32
    %46 = arith.extui %45 : i1 to i32
    %c0_i32_20 = arith.constant 0 : i32
    %47 = arith.cmpi ne, %46, %c0_i32_20 : i32
    scf.if %47 {
      %c0_21 = arith.constant 0 : index
      %c0_22 = arith.constant 0 : index
      %48 = vector.load %arg7[%c0_21, %c0_22] : memref<1x256xf32, #tpu.memory_space<vmem>>, vector<1x256xf32>
      %49 = vector.shape_cast %48 : vector<1x256xf32> to vector<1x1x256xf32>
      %cst_23 = arith.constant dense<0.000000e+00> : vector<1xf32>
      %50 = vector.multi_reduction <add>, %49, %cst_23 [1, 2] : vector<1x1x256xf32> to vector<1xf32>
      %51 = vector.shape_cast %50 : vector<1xf32> to vector<1x1x1xf32>
      %52 = vector.extract %51[0, 0, 0] : f32 from vector<1x1x1xf32>
      %53 = vector.broadcast %52 : f32 to vector<1x1x1xf32>
      %c0_24 = arith.constant 0 : index
      %c0_25 = arith.constant 0 : index
      %c0_26 = arith.constant 0 : index
      %54 = vector.load %arg5[%c0_24, %c0_25, %c0_26] : memref<1x1x1xf32, #tpu.memory_space<vmem>>, vector<1x1x1xf32>
      tpu.vector_store %arg5[%c0_24, %c0_25, %c0_26], %53 {strides = array<i32>} : memref<1x1x1xf32, #tpu.memory_space<vmem>>, vector<1x1x1xf32>,
      %c0_27 = arith.constant 0 : index
      %c0_28 = arith.constant 0 : index
      %55 = vector.load %arg8[%c0_27, %c0_28] : memref<1x256xf32, #tpu.memory_space<vmem>>, vector<1x256xf32>
      %56 = vector.shape_cast %55 : vector<1x256xf32> to vector<1x1x256xf32>
      %cst_29 = arith.constant dense<0.000000e+00> : vector<1xf32>
      %57 = vector.multi_reduction <add>, %56, %cst_29 [1, 2] : vector<1x1x256xf32> to vector<1xf32>
      %58 = vector.shape_cast %57 : vector<1xf32> to vector<1x1x1xf32>
      %59 = vector.extract %58[0, 0, 0] : f32 from vector<1x1x1xf32>
      %60 = vector.broadcast %59 : f32 to vector<1x1x1xf32>
      %c0_30 = arith.constant 0 : index
      %c0_31 = arith.constant 0 : index
      %c0_32 = arith.constant 0 : index
      %61 = vector.load %arg6[%c0_30, %c0_31, %c0_32] : memref<1x1x1xf32, #tpu.memory_space<vmem>>, vector<1x1x1xf32>
      tpu.vector_store %arg6[%c0_30, %c0_31, %c0_32], %60 {strides = array<i32>} : memref<1x1x1xf32, #tpu.memory_space<vmem>>, vector<1x1x1xf32>,
    } else {
    }
    return
  }
  func.func @transform_0(%arg0: i32, %arg1: i32, %arg2: i32) -> (i32, i32, i32) {
    %c1_i32 = arith.constant 1 : i32
    %0 = arith.muli %arg1, %c1_i32 : i32
    %1 = arith.addi %0, %arg2 : i32
    %c0_i32 = arith.constant 0 : i32
    %c0_i32_0 = arith.constant 0 : i32
    return %arg0, %c0_i32, %1 : i32, i32, i32
  }
  func.func @transform_1(%arg0: i32, %arg1: i32, %arg2: i32) -> (i32, i32, i32) {
    %c1_i32 = arith.constant 1 : i32
    %0 = arith.muli %arg1, %c1_i32 : i32
    %1 = arith.addi %0, %arg2 : i32
    %c0_i32 = arith.constant 0 : i32
    %c0_i32_0 = arith.constant 0 : i32
    return %arg0, %c0_i32, %1 : i32, i32, i32
  }
  func.func @transform_2(%arg0: i32, %arg1: i32, %arg2: i32) -> (i32, i32, i32) {
    %c0_i32 = arith.constant 0 : i32
    %c0_i32_0 = arith.constant 0 : i32
    return %arg0, %arg1, %c0_i32 : i32, i32, i32
  }
  func.func @transform_3(%arg0: i32, %arg1: i32, %arg2: i32) -> (i32, i32, i32) {
    %c0_i32 = arith.constant 0 : i32
    %c0_i32_0 = arith.constant 0 : i32
    return %arg0, %arg1, %c0_i32 : i32, i32, i32
  }
}

</mosaic_0001>

<llo_original>
// kernel: tpu_custom_call.1
$region0: #{tpu_custom_call.1}
  #allocation0 [shape = 'u32[]', space=smem, size = 0x4, offset = 0x4, fixed_abs, tag = 'smem constant byte address 0x4 - core index']
  #allocation1 [shape = 'u32[144,128]{1,0:T(1,128)}', space=vmem, size = 0x12000, scoped, tag = 'internal scratch']
  #allocation2 [shape = 'f32[1,256]{1,0:T(1,128)}', space=vmem, size = 0x400, scoped, tag = 'scratch operand']
  #allocation3 [shape = 'f32[1,256]{1,0:T(1,128)}', space=vmem, size = 0x400, scoped, tag = 'scratch operand']
  %s0 = inlined_call_operand.hbm [shape: f32[2,4,256], index: 0, kind: input, shape index: {}]
  %s1 = inlined_call_operand.hbm [shape: s32[2,1,256], index: 1, kind: input, shape index: {}]
  %s2 = inlined_call_operand.vmem [shape: f32[2,1,1], index: 2, kind: output, shape index: {0}]
  %s3 = inlined_call_operand.vmem [shape: f32[2,1,1], index: 3, kind: output, shape index: {1}]
  %4 = xla_tuple %s2, %s3
  %s5 = sld [smem:[#allocation0]]
  $region65: #{tpu_custom_call.1} parent=0
    _
  %s7 = ssub.s32 1, %s5
  %s8 = scalar_select 0, %s7, %s5
  $region1: #{tpu_custom_call.1} parent=0
    #allocation4 [shape = 'u8[8192]{0}', space=vmem, size = 0x2000, scoped, tag = 'input window, operand 0']
    #allocation5 [shape = 's32[2]{0}', space=sflag, size = 0x8, scoped, tag = 'scoped memory for tpu_custom_call.1']
    #allocation6 [shape = 'u8[2048]{0}', space=vmem, size = 0x800, scoped, tag = 'input window, operand 1']
    #allocation7 [shape = 's32[2]{0}', space=sflag, size = 0x8, scoped, tag = 'scoped memory for tpu_custom_call.1']
    %9 = vsyncpa [#allocation5], 0
    %s10 = scalar_lea.sflag [#allocation5], 1
    %11 = vsyncpa %s10, 0
    %12 = vsyncpa [#allocation7], 0
    %s13 = scalar_lea.sflag [#allocation7], 1
    %14 = vsyncpa %s13, 0
    loop: start=0, step=1, limit=4
    $region2: #{tpu_custom_call.1} parent=1 // loop_pre_header
      _
    $region3: #{tpu_custom_call.1} parent=1 // loop_header
      %s16 = sphi 0, %s20
      %p17 = scmp.ge.s32.totalorder %s16, 4
      %s23 = sphi 0, %s42
      %s24 = sphi 0, %s38
      %s25 = sphi 0, %s34
      %s26 = sphi 0, %s23
      %s27 = sphi 0, %s24
      %s28 = sphi 0, %s25
      %s29 = sphi 0, %s26
      %s30 = sphi 0, %s27
      %s31 = sphi 0, %s28
      %s49 = sphi 0, %s51
      %s52 = sphi 0, %s49
      %s53 = sphi 0, %s52
      %s69 = sphi 0, %s53
      %s79 = sphi 0, %s81
      %s82 = sphi 0, %s79
      %s83 = sphi 0, %s82
      %s99 = sphi 0, %s83
      %s107 = sphi 0, %s109
      %s110 = sphi 0, %s107
      %s111 = sphi 0, %s110
      %s127 = sphi 0, %s111
      %s135 = sphi 0, %s137
      %s138 = sphi 0, %s135
      %s139 = sphi 0, %s138
      %s155 = sphi 0, %s139
    $region4: #{tpu_custom_call.1} parent=1 // loop_header_branch
      %19 = sbr.rel (%p17) target = $region8
    $region5: #{tpu_custom_call.1} parent=1 // loop_body
      %s21 = ssub.s32 %s16, 1
      %s22 = ssub.s32 %s16, 2
      %s32 = sadd.s32 1, %s25
      %p33 = scmp.ge.s32.totalorder %s32, 1
      %s34 = scalar_select %p33, 0, %s32
      %s35 = sadd.s32 1, %s24
      %s36 = scalar_select %p33, %s35, %s24
      %p37 = scmp.ge.s32.totalorder %s36, 1
      %s38 = scalar_select %p37, 0, %s36
      %s39 = sadd.s32 1, %s23
      %s40 = scalar_select %p37, %s39, %s23
      %p41 = scmp.ge.s32.totalorder %s40, 2
      %s42 = scalar_select %p41, 0, %s40
      %s43 = sadd.s32 %s24, %s25
      %s44 = sadd.s32 %s38, %s34
      %s45 = ssub.s32 %s23, %s42
      %s46 = ssub.s32 %s43, %s44
      %s47 = sor.u32 %s45, %s46
      %p48 = scmp.eq.s32.totalorder %s47, 0
      %s50 = sadd.s32 %s49, 1
      %s51 = scalar_select %p48, %s49, %s50
      %p54 = pneg %p48
      %p55 = scmp.eq.s32.totalorder %s16, 1
      %p56 = por %p54, %p55
      %p57 = scmp.ne.s32.totalorder %s49, %s52
      %p58 = scmp.eq.s32.totalorder %s16, 0
      %p59 = por %p57, %p58
      %p60 = scmp.ne.s32.totalorder %s49, %s52
      %p61 = scmp.eq.s32.totalorder %s21, 1
      %p62 = por %p60, %p61
      %p63 = scmp.ne.s32.totalorder %s52, %s53
      %p64 = scmp.eq.s32.totalorder %s21, 0
      %p65 = por %p63, %p64
      %p66 = scmp.ne.s32.totalorder %s52, %s53
      %p67 = scmp.eq.s32.totalorder %s22, 1
      %p68 = por %p66, %p67
      %p70 = scmp.ne.s32.totalorder %s53, %s69
      %p71 = scmp.eq.s32.totalorder %s22, 0
      %p72 = por %p70, %p71
      %s73 = sadd.s32 %s24, %s25
      %s74 = sadd.s32 %s38, %s34
      %s75 = ssub.s32 %s23, %s42
      %s76 = ssub.s32 %s73, %s74
      %s77 = sor.u32 %s75, %s76
      %p78 = scmp.eq.s32.totalorder %s77, 0
      %s80 = sadd.s32 %s79, 1
      %s81 = scalar_select %p78, %s79, %s80
      %p84 = pneg %p78
      %p85 = scmp.eq.s32.totalorder %s16, 1
      %p86 = por %p84, %p85
      %p87 = scmp.ne.s32.totalorder %s79, %s82
      %p88 = scmp.eq.s32.totalorder %s16, 0
      %p89 = por %p87, %p88
      %p90 = scmp.ne.s32.totalorder %s79, %s82
      %p91 = scmp.eq.s32.totalorder %s21, 1
      %p92 = por %p90, %p91
      %p93 = scmp.ne.s32.totalorder %s82, %s83
      %p94 = scmp.eq.s32.totalorder %s21, 0
      %p95 = por %p93, %p94
      %p96 = scmp.ne.s32.totalorder %s82, %s83
      %p97 = scmp.eq.s32.totalorder %s22, 1
      %p98 = por %p96, %p97
      %p100 = scmp.ne.s32.totalorder %s83, %s99
      %p101 = scmp.eq.s32.totalorder %s22, 0
      %p102 = por %p100, %p101
      %s103 = ssub.s32 %s23, %s42
      %s104 = ssub.s32 %s24, %s38
      %s105 = sor.u32 %s103, %s104
      %p106 = scmp.eq.s32.totalorder %s105, 0
      %s108 = sadd.s32 %s107, 1
      %s109 = scalar_select %p106, %s107, %s108
      %p112 = pneg %p106
      %p113 = scmp.eq.s32.totalorder %s16, 1
      %p114 = por %p112, %p113
      %p115 = scmp.ne.s32.totalorder %s107, %s110
      %p116 = scmp.eq.s32.totalorder %s16, 0
      %p117 = por %p115, %p116
      %p118 = scmp.ne.s32.totalorder %s107, %s110
      %p119 = scmp.eq.s32.totalorder %s21, 1
      %p120 = por %p118, %p119
      %p121 = scmp.ne.s32.totalorder %s110, %s111
      %p122 = scmp.eq.s32.totalorder %s21, 0
      %p123 = por %p121, %p122
      %p124 = scmp.ne.s32.totalorder %s110, %s111
      %p125 = scmp.eq.s32.totalorder %s22, 1
      %p126 = por %p124, %p125
      %p128 = scmp.ne.s32.totalorder %s111, %s127
      %p129 = scmp.eq.s32.totalorder %s22, 0
      %p130 = por %p128, %p129
      %s131 = ssub.s32 %s23, %s42
      %s132 = ssub.s32 %s24, %s38
      %s133 = sor.u32 %s131, %s132
      %p134 = scmp.eq.s32.totalorder %s133, 0
      %s136 = sadd.s32 %s135, 1
      %s137 = scalar_select %p134, %s135, %s136
      %p140 = pneg %p134
      %p141 = scmp.eq.s32.totalorder %s16, 1
      %p142 = por %p140, %p141
      %p143 = scmp.ne.s32.totalorder %s135, %s138
      %p144 = scmp.eq.s32.totalorder %s16, 0
      %p145 = por %p143, %p144
      %p146 = scmp.ne.s32.totalorder %s135, %s138
      %p147 = scmp.eq.s32.totalorder %s21, 1
      %p148 = por %p146, %p147
      %p149 = scmp.ne.s32.totalorder %s138, %s139
      %p150 = scmp.eq.s32.totalorder %s21, 0
      %p151 = por %p149, %p150
      %p152 = scmp.ne.s32.totalorder %s138, %s139
      %p153 = scmp.eq.s32.totalorder %s22, 1
      %p154 = por %p152, %p153
      %p156 = scmp.ne.s32.totalorder %s139, %s155
      %p157 = scmp.eq.s32.totalorder %s22, 0
      %p158 = por %p156, %p157
      %p159 = scmp.le.s32.totalorder 1, %s16
      %p160 = scmp.lt.s32.totalorder %s16, 3
      %p161 = pnand %p159, %p160
      %p162 = pneg %p161
      // Predicated region
      $region9: #{tpu_custom_call.1} parent=5 // pred_check
        _
      $region10: #{tpu_custom_call.1} parent=5 // pred_check_branch
        %164 = sbr.rel (%p161) target = $region12
      $region11: #{tpu_custom_call.1} parent=5 // pred_region
        %s165 = ssub.s32 %s16, 1
      $region12: #{tpu_custom_call.1} parent=5 // pred_fallthru
        _
      %p166 = scmp.lt.s32.totalorder %s16, 2
      // Predicated region
      $region13: #{tpu_custom_call.1} parent=5 // pred_check
        %p167 = pneg %p166
      $region14: #{tpu_custom_call.1} parent=5 // pred_check_branch
        %169 = sbr.rel (%p167) target = $region16
      $region15: #{tpu_custom_call.1} parent=5 // pred_region
        // Predicated region
        $region17: #{tpu_custom_call.1} parent=15 // pred_check
          %p170 = pneg %p59
        $region18: #{tpu_custom_call.1} parent=15 // pred_check_branch
          %172 = sbr.rel (%p170) target = $region20
        $region19: #{tpu_custom_call.1} parent=15 // pred_region
          %s173 = sand.u32 %s49, 1
          %s174 = scalar_lea.sflag [#allocation5], %s173
          %s175 = sand.u32 %s49, 1
          %s176 = smul.addr %s175, 8
          %s177 = scalar_lea.vmem [#allocation4], %s176
          %s178 = sadd.s32 %s24, %s25
          %s179 = smul.u32 2, %s178
          %s181 = ssub.s32 128, 128
          %182 = vsyncadd %s174, %s181
          %s183 = smul.addr %s23, 2
          %s184 = sadd.s32 %s179, %s183
          %s185 = smul.addr %s184, 64
          %s186 = scalar_lea.hbm %s0, %s185
          %s188 = sshll.u32 %s177, 4
          %s189 = int_to_ptr.vmem [resolvable:$true] %s188
          %191 = dma.hbm_to_vmem [thread:$0]  %s186, 128, %s189, %s174
        $region20: #{tpu_custom_call.1} parent=15 // pred_fallthru
          _
        // Predicated region
        $region21: #{tpu_custom_call.1} parent=15 // pred_check
          %p192 = pneg %p89
        $region22: #{tpu_custom_call.1} parent=15 // pred_check_branch
          %194 = sbr.rel (%p192) target = $region24
        $region23: #{tpu_custom_call.1} parent=15 // pred_region
          %s195 = sand.u32 %s79, 1
          %s196 = scalar_lea.sflag [#allocation7], %s195
          %s197 = sand.u32 %s79, 1
          %s198 = smul.addr %s197, 2
          %s199 = scalar_lea.vmem [#allocation6], %s198
          %s200 = sadd.s32 %s24, %s25
          %s201 = smul.u32 2, %s200
          %s203 = ssub.s32 32, 32
          %204 = vsyncadd %s196, %s203
          %s205 = smul.addr %s23, 2
          %s206 = sadd.s32 %s201, %s205
          %s207 = smul.addr %s206, 16
          %s208 = scalar_lea.hbm %s1, %s207
          %s210 = sshll.u32 %s199, 4
          %s211 = int_to_ptr.vmem [resolvable:$true] %s210
          %213 = dma.hbm_to_vmem [thread:$0]  %s208, 32, %s211, %s196
        $region24: #{tpu_custom_call.1} parent=15 // pred_fallthru
          _
      $region16: #{tpu_custom_call.1} parent=5 // pred_fallthru
        _
      %p214 = scmp.le.s32.totalorder 1, %s16
      %p215 = scmp.lt.s32.totalorder %s16, 3
      %p216 = pnand %p214, %p215
      %p217 = pneg %p216
      // Predicated region
      $region25: #{tpu_custom_call.1} parent=5 // pred_check
        _
      $region26: #{tpu_custom_call.1} parent=5 // pred_check_branch
        %219 = sbr.rel (%p216) target = $region28
      $region27: #{tpu_custom_call.1} parent=5 // pred_region
        %s220 = ssub.s32 %s16, 1
        %s221 = sand.u32 %s52, 1
        %s222 = scalar_lea.sflag [#allocation5], %s221
        %s223 = sand.u32 %s52, 1
        %s224 = smul.addr %s223, 8
        %s225 = scalar_lea.vmem [#allocation4], %s224
        // Predicated region
        $region29: #{tpu_custom_call.1} parent=27 // pred_check
          %p226 = pneg %p65
        $region30: #{tpu_custom_call.1} parent=27 // pred_check_branch
          %228 = sbr.rel (%p226) target = $region32
        $region31: #{tpu_custom_call.1} parent=27 // pred_region
          %229 = dma.done %s222, 128
        $region32: #{tpu_custom_call.1} parent=27 // pred_fallthru
          _
        %s230 = sand.u32 %s82, 1
        %s231 = scalar_lea.sflag [#allocation7], %s230
        %s232 = sand.u32 %s82, 1
        %s233 = smul.addr %s232, 2
        %s234 = scalar_lea.vmem [#allocation6], %s233
        // Predicated region
        $region33: #{tpu_custom_call.1} parent=27 // pred_check
          %p235 = pneg %p95
        $region34: #{tpu_custom_call.1} parent=27 // pred_check_branch
          %237 = sbr.rel (%p235) target = $region36
        $region35: #{tpu_custom_call.1} parent=27 // pred_region
          %238 = dma.done %s231, 32
        $region36: #{tpu_custom_call.1} parent=27 // pred_fallthru
          _
        %s239 = sand.u32 %s52, 1
        %s240 = scalar_lea.sflag [#allocation5], %s239
        %s241 = sand.u32 %s52, 1
        %s242 = smul.addr %s241, 8
        %s243 = scalar_lea.vmem [#allocation4], %s242
        %p244 = pneg %p65
        %p245 = pneg %p62
        %s246 = sand.u32 %s82, 1
        %s247 = scalar_lea.sflag [#allocation7], %s246
        %s248 = sand.u32 %s82, 1
        %s249 = smul.addr %s248, 2
        %s250 = scalar_lea.vmem [#allocation6], %s249
        %p251 = pneg %p95
        %p252 = pneg %p92
        %p253 = pneg %p123
        %p254 = pneg %p120
        %p255 = scmp.lt.s32.totalorder %s26, 1
        %s256 = scalar_select %p255, %s26, 1
        %p257 = scmp.lt.s32.totalorder %s27, 0
        %s258 = scalar_select %p257, %s27, 0
        %s259 = sadd.s32 %s258, %s256
        %s260 = scalar_lea.vmem %s2, %s259
        %p261 = pneg %p151
        %p262 = pneg %p148
        %p263 = scmp.lt.s32.totalorder %s26, 1
        %s264 = scalar_select %p263, %s26, 1
        %p265 = scmp.lt.s32.totalorder %s27, 0
        %s266 = scalar_select %p265, %s27, 0
        %s267 = sadd.s32 %s266, %s264
        %s268 = scalar_lea.vmem %s3, %s267
        %s269 = sadd.s32 %s27, %s28
        %s270 = smul.u32 2, %s269
        %s271 = sadd.s32 %s27, %s28
        %s272 = smul.u32 2, %s271
        %p273 = scmp.lt.s32.totalorder %s26, 1
        %s274 = scalar_select %p273, %s26, 1
        %p275 = scmp.lt.s32.totalorder %s27, 0
        %s276 = scalar_select %p275, %s27, 0
        %s277 = sadd.s32 %s276, %s274
        %s278 = scalar_lea.vmem %s2, %s277
        %p279 = scmp.lt.s32.totalorder %s26, 1
        %s280 = scalar_select %p279, %s26, 1
        %p281 = scmp.lt.s32.totalorder %s27, 0
        %s282 = scalar_select %p281, %s27, 0
        %s283 = sadd.s32 %s282, %s280
        %s284 = scalar_lea.vmem %s3, %s283
        %p285 = scmp.eq.s32.totalorder %s28, 0
        // Predicated region
        $region37: #{tpu_custom_call.1} parent=27 // pred_check
          %p286 = pneg %p285
        $region38: #{tpu_custom_call.1} parent=27 // pred_check_branch
          %288 = sbr.rel (%p286) target = $region40
        $region39: #{tpu_custom_call.1} parent=27 // pred_region
          %v289 = vlaneseq
          %vm290 = vcmp.ge.s32.totalorder %v289, 0
          %vm291 = vcmp.lt.s32.totalorder %v289, 256
          %vm292 = vmand %vm290, %vm291
          %293 = vst.msk [vmem:[#allocation2] sm:$0x3] %vm292, 0.0
          %294 = vst.msk [vmem:[#allocation3] sm:$0x3] %vm292, 0.0
        $region40: #{tpu_custom_call.1} parent=27 // pred_fallthru
          _
        %v295 = vld [vmem:[%s234] sm:$0x3]
        %v296 = vld [vmem:[%s225] sm:$0xff]
        %v298 = vcombine.high %v296, %v296
        %vm300 = vcmask 1043456
        %v301 = vsel %vm300, %v296, -inf
        %v302 = vrot.slane %v301, 4
        %v303 = vmax.f32 %v301, %v302
        %v304 = vrot.slane %v303, 2
        %v305 = vmax.f32 %v303, %v304
        %v306 = vrot.slane %v305, 1
        %v307 = vmax.f32 %v305, %v306
        %v308 = vsel %vm300, %v298, -inf
        %v309 = vrot.slane %v308, 4
        %v310 = vmax.f32 %v308, %v309
        %v311 = vrot.slane %v310, 2
        %v312 = vmax.f32 %v310, %v311
        %v313 = vrot.slane %v312, 1
        %v314 = vmax.f32 %v312, %v313
        %v317 = vcombine.low %v307, %v314
        %v319 = vsub.f32 %v296, %v317
        %v320 = vmul.f32 %v319, 1.442695
        %v321 = vpow.pop %v320
        %v323 = vcombine.high %v321, %v321
        %v325 = vsel %vm300, %v321, 0.0
        %v326 = vrot.slane %v325, 4
        %v327 = vadd.f32 %v325, %v326
        %v328 = vrot.slane %v327, 2
        %v329 = vadd.f32 %v327, %v328
        %v330 = vrot.slane %v329, 1
        %v331 = vadd.f32 %v329, %v330
        %v332 = vsel %vm300, %v323, 0.0
        %v333 = vrot.slane %v332, 4
        %v334 = vadd.f32 %v332, %v333
        %v335 = vrot.slane %v334, 2
        %v336 = vadd.f32 %v334, %v335
        %v337 = vrot.slane %v336, 1
        %v338 = vadd.f32 %v336, %v337
        %v339 = vlaneseq
        %v340 = vshrl.u32 %v339, 7
        %v341 = vlaneseq
        %v342 = vshrl.u32 %v341, 7
        %v343 = vsub.s32 0, %v342
        %v344 = vrot.slane %v295, %v343
        %v345 = vlaneseq
        %v346 = vshrl.u32 %v345, 7
        %v347 = vsub.s32 1, %v346
        %v348 = vrot.slane %v295, %v347
        %vm349 = vcmp.eq.s32.totalorder %v340, %v344
        %vm350 = vcmp.eq.s32.totalorder %v340, %v348
        %v352 = vcombine.high %v319, %v319
        %v354 = vsel %vm349, %v319, 0.0
        %v355 = vsel %vm350, %v352, 0.0
        %v356 = vsel %vm300, %v354, 0.0
        %v357 = vrot.slane %v356, 4
        %v358 = vadd.f32 %v356, %v357
        %v359 = vrot.slane %v358, 2
        %v360 = vadd.f32 %v358, %v359
        %v361 = vrot.slane %v360, 1
        %v362 = vadd.f32 %v360, %v361
        %v363 = vsel %vm300, %v355, 0.0
        %v364 = vrot.slane %v363, 4
        %v365 = vadd.f32 %v363, %v364
        %v366 = vrot.slane %v365, 2
        %v367 = vadd.f32 %v365, %v366
        %v368 = vrot.slane %v367, 1
        %v369 = vadd.f32 %v367, %v368
        %v370 = vlaneseq
        %v371 = vand.u32 %v370, 127
        %v372 = vadd.s32 %v371, 128
        %s373 = sadd.s32 %s27, %s28
        %s374 = smul.u32 %s373, 256
        %v375 = vstv %s374
        %v376 = vadd.s32 %v375, %v371
        %v377 = vadd.s32 %v375, %v372
        %vm378 = vcmp.lt.s32.totalorder %v376, 256
        %vm379 = vcmp.lt.s32.totalorder %v377, 256
        %vm380 = vcmp.ne.s32.totalorder %v295, 255
        %v381 = vsel %vm378, 1, 0
        %v382 = vsel %vm379, 1, 0
        %v383 = vcombine.low %v381, %v382
        %v385 = vunpack.c.l.s4 1966171168
        %v386 = vunpack.c.0.s8 %v385
        %v387 = vlaneseq
        %v388 = vshrl.u32 %v387, 7
        %v389 = vsub.s32 %v386, %v388
        %v390 = vrot.slane %v383, %v389
        %v392 = vunpack.c.l.s4 1966171168
        %v393 = vunpack.c.0.s8 %v392
        %v394 = vlaneseq
        %v395 = vshrl.u32 %v394, 7
        %v396 = vsub.s32 %v393, %v395
        %v397 = vrot.slane %v390, %v396
        %vm398 = vcmp.ne.s32.totalorder %v397, 0
        %vm399 = vmand %vm380, %vm398
        %v400 = vlog2.pop %v331
        %v401 = vmul.f32 %v400, 0.6931472
        %v402 = vlog2.pop %v338
        %v403 = vmul.f32 %v402, 0.6931472
        %v404 = vsub.f32 %v401, %v362
        %v405 = vsub.f32 %v403, %v369
        %v408 = vcombine.low %v404, %v405
        %v410 = vunpack.c.l.s4 1966171168
        %v411 = vunpack.c.0.s8 %v410
        %v412 = vlaneseq
        %v413 = vshrl.u32 %v412, 7
        %v414 = vsub.s32 %v411, %v413
        %v415 = vrot.slane %v408, %v414
        %v417 = vunpack.c.l.s4 1966171168
        %v418 = vunpack.c.0.s8 %v417
        %v419 = vlaneseq
        %v420 = vshrl.u32 %v419, 7
        %v421 = vsub.s32 %v418, %v420
        %v422 = vrot.slane %v415, %v421
        %v424 = vsel %vm399, %v422, 0.0
        %v425 = vld [vmem:[#allocation2] sm:$0x3]
        %v426 = vadd.f32 %v425, %v424
        %v427 = vlaneseq
        %vm428 = vcmp.ge.s32.totalorder %v427, 0
        %vm429 = vcmp.lt.s32.totalorder %v427, 256
        %vm430 = vmand %vm428, %vm429
        %431 = vst.msk [vmem:[#allocation2] sm:$0x3] %vm430, %v426
        %v432 = vld [vmem:[#allocation3] sm:$0x3]
        %v433 = vsel %vm399, 1, 0
        %v434 = vcvt.s32.f32 %v433
        %v435 = vadd.f32 %v432, %v434
        %436 = vst.msk [vmem:[#allocation3] sm:$0x3] %vm430, %v435
        // Predicated region
        $region41: #{tpu_custom_call.1} parent=27 // pred_check
          %p437 = pneg %p285
        $region42: #{tpu_custom_call.1} parent=27 // pred_check_branch
          %439 = sbr.rel (%p437) target = $region44
        $region43: #{tpu_custom_call.1} parent=27 // pred_region
          %v440 = vld [vmem:[#allocation2] sm:$0x3]
          %v442 = vlaneseq
          %v443 = vshrl.u32 %v442, 7
          %v444 = vsub.s32 0, %v443
          %v445 = vrot.slane %v440, %v444
          %v446 = vlaneseq
          %v447 = vshrl.u32 %v446, 7
          %v448 = vsub.s32 1, %v447
          %v449 = vrot.slane %v440, %v448
          %vm452 = vcmask 1040384
          %v453 = vsel %vm452, %v445, 0.0
          %v454 = vsel %vm452, %v449, 0.0
          %v455 = vadd.f32 %v453, %v454
          %456 = vadd.xlane.f32.xlu0 %v455
          %v457 = vpop.xlane.xlu0 %456
          %v458 = vrot.slane %v457, 4
          %v459 = vadd.f32 %v457, %v458
          %v460 = vrot.slane %v459, 2
          %v461 = vadd.f32 %v459, %v460
          %v462 = vrot.slane %v461, 1
          %v463 = vadd.f32 %v461, %v462
          %s464 = vtos %v463
          %v465 = vstv %s464
          %vm466 = vcmask 0
          %467 = vst.msk [vmem:[%s278] sm:$0x1] %vm466, %v465
          %v468 = vld [vmem:[#allocation3] sm:$0x3]
          %v470 = vlaneseq
          %v471 = vshrl.u32 %v470, 7
          %v472 = vsub.s32 0, %v471
          %v473 = vrot.slane %v468, %v472
          %v474 = vlaneseq
          %v475 = vshrl.u32 %v474, 7
          %v476 = vsub.s32 1, %v475
          %v477 = vrot.slane %v468, %v476
          %v480 = vsel %vm452, %v473, 0.0
          %v481 = vsel %vm452, %v477, 0.0
          %v482 = vadd.f32 %v480, %v481
          %483 = vadd.xlane.f32.xlu0 %v482
          %v484 = vpop.xlane.xlu0 %483
          %v485 = vrot.slane %v484, 4
          %v486 = vadd.f32 %v484, %v485
          %v487 = vrot.slane %v486, 2
          %v488 = vadd.f32 %v486, %v487
          %v489 = vrot.slane %v488, 1
          %v490 = vadd.f32 %v488, %v489
          %s491 = vtos %v490
          %v492 = vstv %s491
          %493 = vst.msk [vmem:[%s284] sm:$0x1] %vm466, %v492
        $region44: #{tpu_custom_call.1} parent=27 // pred_fallthru
          _
        %p494 = scmp.lt.s32.totalorder %s26, 1
        %s495 = scalar_select %p494, %s26, 1
        %p496 = scmp.lt.s32.totalorder %s27, 0
        %s497 = scalar_select %p496, %s27, 0
        %s498 = sadd.s32 %s497, %s495
        %s499 = scalar_lea.vmem %s2, %s498
        %p500 = scmp.lt.s32.totalorder %s26, 1
        %s501 = scalar_select %p500, %s26, 1
        %p502 = scmp.lt.s32.totalorder %s27, 0
        %s503 = scalar_select %p502, %s27, 0
        %s504 = sadd.s32 %s503, %s501
        %s505 = scalar_lea.vmem %s3, %s504
        // Predicated region
        $region45: #{tpu_custom_call.1} parent=27 // pred_check
          %p506 = pneg %p120
        $region46: #{tpu_custom_call.1} parent=27 // pred_check_branch
          %508 = sbr.rel (%p506) target = $region48
        $region47: #{tpu_custom_call.1} parent=27 // pred_region
          _
        $region48: #{tpu_custom_call.1} parent=27 // pred_fallthru
          _
        // Predicated region
        $region49: #{tpu_custom_call.1} parent=27 // pred_check
          %p509 = pneg %p148
        $region50: #{tpu_custom_call.1} parent=27 // pred_check_branch
          %511 = sbr.rel (%p509) target = $region52
        $region51: #{tpu_custom_call.1} parent=27 // pred_region
          _
        $region52: #{tpu_custom_call.1} parent=27 // pred_fallthru
          _
      $region28: #{tpu_custom_call.1} parent=5 // pred_fallthru
        _
      %p512 = scmp.le.s32.totalorder 2, %s16
      // Predicated region
      $region53: #{tpu_custom_call.1} parent=5 // pred_check
        %p513 = pneg %p512
      $region54: #{tpu_custom_call.1} parent=5 // pred_check_branch
        %515 = sbr.rel (%p513) target = $region56
      $region55: #{tpu_custom_call.1} parent=5 // pred_region
        %s516 = ssub.s32 %s16, 2
        // Predicated region
        $region57: #{tpu_custom_call.1} parent=55 // pred_check
          %p517 = pneg %p126
        $region58: #{tpu_custom_call.1} parent=55 // pred_check_branch
          %519 = sbr.rel (%p517) target = $region60
        $region59: #{tpu_custom_call.1} parent=55 // pred_region
          %p520 = scmp.lt.s32.totalorder %s29, 1
          %s521 = scalar_select %p520, %s29, 1
          %p522 = scmp.lt.s32.totalorder %s30, 0
          %s523 = scalar_select %p522, %s30, 0
          %s524 = sadd.s32 %s523, %s521
          %s525 = scalar_lea.vmem %s2, %s524
        $region60: #{tpu_custom_call.1} parent=55 // pred_fallthru
          _
        // Predicated region
        $region61: #{tpu_custom_call.1} parent=55 // pred_check
          %p526 = pneg %p154
        $region62: #{tpu_custom_call.1} parent=55 // pred_check_branch
          %528 = sbr.rel (%p526) target = $region64
        $region63: #{tpu_custom_call.1} parent=55 // pred_region
          %p529 = scmp.lt.s32.totalorder %s29, 1
          %s530 = scalar_select %p529, %s29, 1
          %p531 = scmp.lt.s32.totalorder %s30, 0
          %s532 = scalar_select %p531, %s30, 0
          %s533 = sadd.s32 %s532, %s530
          %s534 = scalar_lea.vmem %s3, %s533
        $region64: #{tpu_custom_call.1} parent=55 // pred_fallthru
          _
      $region56: #{tpu_custom_call.1} parent=5 // pred_fallthru
        _
    $region6: #{tpu_custom_call.1} parent=1 // loop_footer
      %s20 = sadd.s32 1, %s16
    $region7: #{tpu_custom_call.1} parent=1 // loop_footer_branch
      %15 = sbr.rel target = $region3
    $region8: #{tpu_custom_call.1} parent=1 // loop_exit
      _
    %535 = vsyncpa [#allocation5], 1
    %s536 = scalar_lea.sflag [#allocation5], 1
    %537 = vsyncpa %s536, 1
    %538 = vsyncpa [#allocation7], 1
    %s539 = scalar_lea.sflag [#allocation7], 1
    %540 = vsyncpa %s539, 1

</llo_original>
